<compile_context>
chip_gen: v5e
topology: v5e:2x2
jax: 0.10.0
libtpu: 0.0.40
codegen_flags: <defaults>
</compile_context>

<pallas_src>
import jax
import jax.numpy as jnp
from jax.experimental import pallas as pl
from jax.experimental.pallas import tpu as pltpu


# ---------------------------------------------------------------------------
# Kernel 1:  P^T[b] = (weight @ G[b])^T
# One CxC MXU matmul + one XLU transpose per target-Gram element; computed
# once per forward and reused for the whole batch.
# ---------------------------------------------------------------------------
def _gram_mix_kernel(w_ref, g_ref, pt_ref):
    # w_ref : (C, C)     shared mixing weight
    # g_ref : (1, C, C)  target Gram matrix G[b]
    # pt_ref: (1, C, C)  output: transpose(weight @ G[b])
    p = jnp.dot(w_ref[...], g_ref[0], preferred_element_type=jnp.float32)
    pt_ref[0] = p.T.astype(pt_ref.dtype)


def compute_pt(weight_2d, G):
    B, C, _ = G.shape
    return pl.pallas_call(
        _gram_mix_kernel,
        out_shape=jax.ShapeDtypeStruct((B, C, C), jnp.float32),
        grid_spec=pltpu.PrefetchScalarGridSpec(
            num_scalar_prefetch=0,
            grid=(B,),
            in_specs=[
                pl.BlockSpec((C, C), lambda b: (0, 0)),
                pl.BlockSpec((1, C, C), lambda b: (b, 0, 0)),
            ],
            out_specs=pl.BlockSpec((1, C, C), lambda b: (b, 0, 0)),
        ),
        compiler_params=pltpu.CompilerParams(
            dimension_semantics=("arbitrary",),
        ),
    )(weight_2d, G)


# ---------------------------------------------------------------------------
# Kernel 2:  Y[n, :, t] = P^T @ X[n, :, t]
# One big MXU matmul per (image, spatial tile): M = C, K = C, N = tile (>=128
# lanes), f32 accumulation.  No wrapper-side transposes of the activations.
# ---------------------------------------------------------------------------
def _apply_kernel(pt_ref, x_ref, o_ref):
    # pt_ref: (1, C, C)   P^T (shared across the batch when B == 1)
    # x_ref : (1, C, T)   flattened spatial tile of one image
    # o_ref : (1, C, T)
    y = jnp.dot(pt_ref[0], x_ref[0], preferred_element_type=jnp.float32)
    o_ref[0] = y.astype(o_ref.dtype)


def _pick_hw_tile(hw, max_tile=2048):
    """Largest lane-dense tile (multiple of 128) that divides hw, capped at
    max_tile; falls back to the full extent (always legal for BlockSpec)."""
    if hw <= max_tile or hw % 128 != 0:
        return hw
    best = 128
    for cand in range(128, max_tile + 1, 128):
        if hw % cand == 0:
            best = cand
    return best


def apply_pt(PT, x_flat):
    N, C, HW = x_flat.shape
    B = PT.shape[0]
    if B not in (1, N):
        raise ValueError("Inspiration: G batch must be 1 or equal to X batch "
                         "(PyTorch expand semantics).")
    T = _pick_hw_tile(HW)
    n_tiles = HW // T

    if B == 1:
        pt_map = lambda n, t: (0, 0, 0)
    else:
        pt_map = lambda n, t: (n, 0, 0)

    return pl.pallas_call(
        _apply_kernel,
        out_shape=jax.ShapeDtypeStruct((N, C, HW), x_flat.dtype),
        grid_spec=pltpu.PrefetchScalarGridSpec(
            num_scalar_prefetch=0,
            grid=(N, n_tiles),
            in_specs=[
                pl.BlockSpec((1, C, C), pt_map),
                pl.BlockSpec((1, C, T), lambda n, t: (n, 0, t)),
            ],
            out_specs=pl.BlockSpec((1, C, T), lambda n, t: (n, 0, t)),
        ),
        compiler_params=pltpu.CompilerParams(
            dimension_semantics=("parallel", "parallel"),
        ),
    )(PT, x_flat)


# ---------------------------------------------------------------------------
# Forward pass (matches Inspiration.forward)
# ---------------------------------------------------------------------------
def inspiration_forward(weight, G, X):
    """weight: (1, C, C) parameter, G: (B, C, C) target Gram, X: (N, C, H, W)."""
    N, C, H, W = X.shape
    PT = compute_pt(weight[0], G)                 # (B, C, C) = (weight @ G)^T
    y = apply_pt(PT, X.reshape(N, C, H * W))      # (N, C, H*W)
    return y.reshape(N, C, H, W)


if __name__ == "__main__":
    key = jax.random.PRNGKey(0)
    kw, kg, kx = jax.random.split(key, 3)

    # Small, MXU/lane-aligned shapes consistent with the module.
    N, C, H, W, B = 2, 128, 16, 16, 1

    # reset_parameters(): weight ~ U(0, 0.02); G is the (set) target Gram.
    weight = jax.random.uniform(kw, (1, C, C), jnp.float32, 0.0, 0.02)
    G = jax.random.normal(kg, (B, C, C), jnp.float32)
    X = jax.random.normal(kx, (N, C, H, W), jnp.float32)

    fwd = jax.jit(inspiration_forward)
    out = jax.block_until_ready(fwd(weight, G, X))

    # Pure-JAX reference (same math as the PyTorch forward).
    P = jnp.einsum("ij,bjk->bik", weight[0], G,
                   precision=jax.lax.Precision.HIGHEST)
    PT = jnp.transpose(P, (0, 2, 1))
    PTn = jnp.broadcast_to(PT, (N, C, C)) if B == 1 else PT
    ref = jnp.einsum("nij,njk->nik", PTn, X.reshape(N, C, -1),
                     precision=jax.lax.Precision.HIGHEST).reshape(X.shape)

    assert out.shape == (N, C, H, W)
    assert out.dtype == jnp.float32
    assert jnp.allclose(out, ref, rtol=2e-2, atol=2e-2)
    print("KERNEL_OK")
</pallas_src>

<mosaic_0001>
module attributes {stable_mosaic.version = 11 : i64} {
  func.func @_apply_kernel(%arg0: i32, %arg1: i32, %arg2: memref<1x128x128xf32, #tpu.memory_space<vmem>>, %arg3: memref<1x128x256xf32, #tpu.memory_space<vmem>>, %arg4: memref<1x128x256xf32, #tpu.memory_space<vmem>>) attributes {dimension_semantics = [#tpu.dimension_semantics<parallel>, #tpu.dimension_semantics<parallel>], iteration_bounds = array<i64: 2, 1>, scalar_prefetch = 0 : i64, scratch_operands = 0 : i64, tpu.core_type = #tpu.core_type<tc>, window_params = [{pipeline_mode = #tpu.pipeline_mode<synchronous>, transform_indices = @transform_0, window_bounds = array<i64: 1, 128, 128>}, {transform_indices = @transform_1, window_bounds = array<i64: 1, 128, 256>}, {transform_indices = @transform_2, window_bounds = array<i64: 1, 128, 256>}]} {
    %c0 = arith.constant 0 : index
    %c0_0 = arith.constant 0 : index
    %c0_1 = arith.constant 0 : index
    %0 = vector.load %arg2[%c0, %c0_0, %c0_1] : memref<1x128x128xf32, #tpu.memory_space<vmem>>, vector<1x128x128xf32>
    %1 = vector.shape_cast %0 : vector<1x128x128xf32> to vector<128x128xf32>
    %c0_2 = arith.constant 0 : index
    %c0_3 = arith.constant 0 : index
    %c0_4 = arith.constant 0 : index
    %2 = vector.load %arg3[%c0_2, %c0_3, %c0_4] : memref<1x128x256xf32, #tpu.memory_space<vmem>>, vector<1x128x256xf32>
    %3 = vector.shape_cast %2 : vector<1x128x256xf32> to vector<128x256xf32>
    %cst = arith.constant dense<0.000000e+00> : vector<128x256xf32>
    %4 = tpu.matmul %1, %3, %cst {dimension_numbers = #tpu.dot_dimension_numbers<[1], [0], [0], [1], [0, 0, 1, 1], [], []>} : vector<128x128xf32>, vector<128x256xf32>, vector<128x256xf32> -> vector<128x256xf32>
    %c0_5 = arith.constant 0 : index
    %c0_6 = arith.constant 0 : index
    %c0_7 = arith.constant 0 : index
    %5 = vector.load %arg4[%c0_5, %c0_6, %c0_7] : memref<1x128x256xf32, #tpu.memory_space<vmem>>, vector<1x128x256xf32>
    %6 = vector.shape_cast %5 : vector<1x128x256xf32> to vector<128x256xf32>
    %7 = vector.shape_cast %4 : vector<128x256xf32> to vector<1x128x256xf32>
    tpu.vector_store %arg4[%c0_5, %c0_6, %c0_7], %7 {strides = array<i32>} : memref<1x128x256xf32, #tpu.memory_space<vmem>>, vector<1x128x256xf32>,
    return
  }
  func.func @transform_0(%arg0: i32, %arg1: i32) -> (i32, i32, i32) {
    %c0_i32 = arith.constant 0 : i32
    %c0_i32_0 = arith.constant 0 : i32
    %c0_i32_1 = arith.constant 0 : i32
    %c0_i32_2 = arith.constant 0 : i32
    return %c0_i32, %c0_i32_0, %c0_i32_1 : i32, i32, i32
  }
  func.func @transform_1(%arg0: i32, %arg1: i32) -> (i32, i32, i32) {
    %c0_i32 = arith.constant 0 : i32
    %c0_i32_0 = arith.constant 0 : i32
    return %arg0, %c0_i32, %arg1 : i32, i32, i32
  }
  func.func @transform_2(%arg0: i32, %arg1: i32) -> (i32, i32, i32) {
    %c0_i32 = arith.constant 0 : i32
    %c0_i32_0 = arith.constant 0 : i32
    return %arg0, %c0_i32, %arg1 : i32, i32, i32
  }
}

module attributes {stable_mosaic.version = 11 : i64} {
  func.func @_gram_mix_kernel(%arg0: i32, %arg1: memref<128x128xf32, #tpu.memory_space<vmem>>, %arg2: memref<1x128x128xf32, #tpu.memory_space<vmem>>, %arg3: memref<1x128x128xf32, #tpu.memory_space<vmem>>) attributes {dimension_semantics = [#tpu.dimension_semantics<arbitrary>], iteration_bounds = array<i64: 1>, scalar_prefetch = 0 : i64, scratch_operands = 0 : i64, tpu.core_type = #tpu.core_type<tc>, window_params = [{pipeline_mode = #tpu.pipeline_mode<synchronous>, transform_indices = @transform_0, window_bounds = array<i64: 128, 128>}, {transform_indices = @transform_1, window_bounds = array<i64: 1, 128, 128>}, {transform_indices = @transform_2, window_bounds = array<i64: 1, 128, 128>}]} {
    %c0 = arith.constant 0 : index
    %c0_0 = arith.constant 0 : index
    %0 = vector.load %arg1[%c0, %c0_0] : memref<128x128xf32, #tpu.memory_space<vmem>>, vector<128x128xf32>
    %c0_1 = arith.constant 0 : index
    %c0_2 = arith.constant 0 : index
    %c0_3 = arith.constant 0 : index
    %1 = vector.load %arg2[%c0_1, %c0_2, %c0_3] : memref<1x128x128xf32, #tpu.memory_space<vmem>>, vector<1x128x128xf32>
    %2 = vector.shape_cast %1 : vector<1x128x128xf32> to vector<128x128xf32>
    %cst = arith.constant dense<0.000000e+00> : vector<128x128xf32>
    %3 = tpu.matmul %0, %2, %cst {dimension_numbers = #tpu.dot_dimension_numbers<[1], [0], [0], [1], [0, 0, 1, 1], [], []>} : vector<128x128xf32>, vector<128x128xf32>, vector<128x128xf32> -> vector<128x128xf32>
    %4 = tpu.transpose %3, [1, 0] : vector<128x128xf32> -> vector<128x128xf32>
    %c0_4 = arith.constant 0 : index
    %c0_5 = arith.constant 0 : index
    %c0_6 = arith.constant 0 : index
    %5 = vector.load %arg3[%c0_4, %c0_5, %c0_6] : memref<1x128x128xf32, #tpu.memory_space<vmem>>, vector<1x128x128xf32>
    %6 = vector.shape_cast %5 : vector<1x128x128xf32> to vector<128x128xf32>
    %7 = vector.shape_cast %4 : vector<128x128xf32> to vector<1x128x128xf32>
    tpu.vector_store %arg3[%c0_4, %c0_5, %c0_6], %7 {strides = array<i32>} : memref<1x128x128xf32, #tpu.memory_space<vmem>>, vector<1x128x128xf32>,
    return
  }
  func.func @transform_0(%arg0: i32) -> (i32, i32) {
    %c0_i32 = arith.constant 0 : i32
    %c0_i32_0 = arith.constant 0 : i32
    %c0_i32_1 = arith.constant 0 : i32
    return %c0_i32, %c0_i32_0 : i32, i32
  }
  func.func @transform_1(%arg0: i32) -> (i32, i32, i32) {
    %c0_i32 = arith.constant 0 : i32
    %c0_i32_0 = arith.constant 0 : i32
    %c0_i32_1 = arith.constant 0 : i32
    return %arg0, %c0_i32, %c0_i32_0 : i32, i32, i32
  }
  func.func @transform_2(%arg0: i32) -> (i32, i32, i32) {
    %c0_i32 = arith.constant 0 : i32
    %c0_i32_0 = arith.constant 0 : i32
    %c0_i32_1 = arith.constant 0 : i32
    return %arg0, %c0_i32, %c0_i32_0 : i32, i32, i32
  }
}

</mosaic_0001>

<llo_original>
// kernel: inspiration_forward.2
$region0: #{inspiration_forward.2}
  #allocation0 [shape = 'u32[]', space=smem, size = 0x4, offset = 0x4, fixed_abs, tag = 'smem constant byte address 0x4 - core index']
  #allocation1 [shape = 'u32[72,128]{1,0:T(1,128)}', space=vmem, size = 0x9000, scoped, tag = 'internal scratch']
  %s0 = inlined_call_operand.hbm [shape: f32[128,128], index: 0, kind: input, shape index: {}]
  %s1 = inlined_call_operand.hbm [shape: f32[1,128,128], index: 1, kind: input, shape index: {}]
  %s2 = inlined_call_operand.vmem [shape: f32[1,128,128], index: 2, kind: output, shape index: {}]
  %s3 = sld [smem:[#allocation0]]
  $region26: #{inspiration_forward.2} parent=0
    _
  %s5 = ssub.s32 1, %s3
  %s6 = scalar_select 0, %s5, %s3
  $region1: #{inspiration_forward.2} parent=0
    #allocation2 [shape = 'u8[65536]{0}', space=vmem, size = 0x10000, scoped, tag = 'input window, operand 0, single buffered']
    #allocation3 [shape = 's32[1]{0}', space=sflag, size = 0x4, scoped, tag = 'scoped memory for inspiration_forward.2']
    #allocation4 [shape = 'u8[65536]{0}', space=vmem, size = 0x10000, scoped, tag = 'input window, operand 1, single buffered']
    #allocation5 [shape = 's32[1]{0}', space=sflag, size = 0x4, scoped, tag = 'scoped memory for inspiration_forward.2']
    %7 = vsyncpa [#allocation3], 0
    %8 = vsyncpa [#allocation5], 0
    // Predicated region
    $region2: #{inspiration_forward.2} parent=1 // pred_check
      _
    $region3: #{inspiration_forward.2} parent=1 // pred_check_branch
      %10 = sbr.rel (0) target = $region5
    $region4: #{inspiration_forward.2} parent=1 // pred_region
      %12 = vsyncadd [#allocation3], 0
      %s13 = sshll.u32 %s0, 4
      %s14 = int_to_ptr.hbm [resolvable:$true] %s13
      %s15 = sshll.u32 [#allocation2], 4
      %s16 = int_to_ptr.vmem [resolvable:$true] %s15
      %21 = dma.hbm_to_vmem [thread:$0]  %s14, 2048, %s16, [#allocation3], 128, 128, 8
    $region5: #{inspiration_forward.2} parent=1 // pred_fallthru
      _
    // Predicated region
    $region6: #{inspiration_forward.2} parent=1 // pred_check
      _
    $region7: #{inspiration_forward.2} parent=1 // pred_check_branch
      %23 = sbr.rel (0) target = $region9
    $region8: #{inspiration_forward.2} parent=1 // pred_region
      %25 = vsyncadd [#allocation5], 0
      %s26 = sshll.u32 %s1, 4
      %s27 = int_to_ptr.hbm [resolvable:$true] %s26
      %s28 = sshll.u32 [#allocation4], 4
      %s29 = int_to_ptr.vmem [resolvable:$true] %s28
      %34 = dma.hbm_to_vmem [thread:$0]  %s27, 2048, %s29, [#allocation5], 128, 128, 8
    $region9: #{inspiration_forward.2} parent=1 // pred_fallthru
      _
    // Predicated region
    $region10: #{inspiration_forward.2} parent=1 // pred_check
      _
    $region11: #{inspiration_forward.2} parent=1 // pred_check_branch
      %36 = sbr.rel (0) target = $region13
    $region12: #{inspiration_forward.2} parent=1 // pred_region
      %38 = dma.done [#allocation3], 2048
    $region13: #{inspiration_forward.2} parent=1 // pred_fallthru
      _
    // Predicated region
    $region14: #{inspiration_forward.2} parent=1 // pred_check
      _
    $region15: #{inspiration_forward.2} parent=1 // pred_check_branch
      %40 = sbr.rel (0) target = $region17
    $region16: #{inspiration_forward.2} parent=1 // pred_region
      %42 = dma.done [#allocation5], 2048
    $region17: #{inspiration_forward.2} parent=1 // pred_fallthru
      _
    %v43 = vld [vmem:[#allocation2] sm:$0xff]
    %v44 = vld [vmem:[#allocation2 + $0x8] sm:$0xff]
    %v45 = vld [vmem:[#allocation2 + $0x10] sm:$0xff]
    %v46 = vld [vmem:[#allocation2 + $0x18] sm:$0xff]
    %v47 = vld [vmem:[#allocation2 + $0x20] sm:$0xff]
    %v48 = vld [vmem:[#allocation2 + $0x28] sm:$0xff]
    %v49 = vld [vmem:[#allocation2 + $0x30] sm:$0xff]
    %v50 = vld [vmem:[#allocation2 + $0x38] sm:$0xff]
    %v51 = vld [vmem:[#allocation2 + $0x40] sm:$0xff]
    %v52 = vld [vmem:[#allocation2 + $0x48] sm:$0xff]
    %v53 = vld [vmem:[#allocation2 + $0x50] sm:$0xff]
    %v54 = vld [vmem:[#allocation2 + $0x58] sm:$0xff]
    %v55 = vld [vmem:[#allocation2 + $0x60] sm:$0xff]
    %v56 = vld [vmem:[#allocation2 + $0x68] sm:$0xff]
    %v57 = vld [vmem:[#allocation2 + $0x70] sm:$0xff]
    %v58 = vld [vmem:[#allocation2 + $0x78] sm:$0xff]
    %v59 = vld [vmem:[#allocation4] sm:$0xff]
    %v60 = vld [vmem:[#allocation4 + $0x8] sm:$0xff]
    %v61 = vld [vmem:[#allocation4 + $0x10] sm:$0xff]
    %v62 = vld [vmem:[#allocation4 + $0x18] sm:$0xff]
    %v63 = vld [vmem:[#allocation4 + $0x20] sm:$0xff]
    %v64 = vld [vmem:[#allocation4 + $0x28] sm:$0xff]
    %v65 = vld [vmem:[#allocation4 + $0x30] sm:$0xff]
    %v66 = vld [vmem:[#allocation4 + $0x38] sm:$0xff]
    %v67 = vld [vmem:[#allocation4 + $0x40] sm:$0xff]
    %v68 = vld [vmem:[#allocation4 + $0x48] sm:$0xff]
    %v69 = vld [vmem:[#allocation4 + $0x50] sm:$0xff]
    %v70 = vld [vmem:[#allocation4 + $0x58] sm:$0xff]
    %v71 = vld [vmem:[#allocation4 + $0x60] sm:$0xff]
    %v72 = vld [vmem:[#allocation4 + $0x68] sm:$0xff]
    %v73 = vld [vmem:[#allocation4 + $0x70] sm:$0xff]
    %v74 = vld [vmem:[#allocation4 + $0x78] sm:$0xff]
    %75 = vmatpush.msra.mxu0 %v74
    %76 = vmatpush.msra.mxu0 %v73
    %77 = vmatpush.msra.mxu0 %v72
    %78 = vmatpush.msra.mxu0 %v71
    %79 = vmatpush.msra.mxu0 %v70
    %80 = vmatpush.msra.mxu0 %v69
    %81 = vmatpush.msra.mxu0 %v68
    %82 = vmatpush.msra.mxu0 %v67
    %83 = vmatpush.msra.mxu0 %v66
    %84 = vmatpush.msra.mxu0 %v65
    %85 = vmatpush.msra.mxu0 %v64
    %86 = vmatpush.msra.mxu0 %v63
    %87 = vmatpush.msra.mxu0 %v62
    %88 = vmatpush.msra.mxu0 %v61
    %89 = vmatpush.msra.mxu0 %v60
    %90 = vmatpush.msra.mxu0 %v59
    %91 = vmatmul.f32.gmra.mxu0 %v43
    %v92 = vpop.f32.mrf.mxu0
    %v93 = vadd.f32 0.0, %v92
    %94 = vmatmul.f32.gmra.mxu0 %v44
    %v95 = vpop.f32.mrf.mxu0
    %v96 = vadd.f32 0.0, %v95
    %97 = vmatmul.f32.gmra.mxu0 %v45
    %v98 = vpop.f32.mrf.mxu0
    %v99 = vadd.f32 0.0, %v98
    %100 = vmatmul.f32.gmra.mxu0 %v46
    %v101 = vpop.f32.mrf.mxu0
    %v102 = vadd.f32 0.0, %v101
    %103 = vmatmul.f32.gmra.mxu0 %v47
    %v104 = vpop.f32.mrf.mxu0
    %v105 = vadd.f32 0.0, %v104
    %106 = vmatmul.f32.gmra.mxu0 %v48
    %v107 = vpop.f32.mrf.mxu0
    %v108 = vadd.f32 0.0, %v107
    %109 = vmatmul.f32.gmra.mxu0 %v49
    %v110 = vpop.f32.mrf.mxu0
    %v111 = vadd.f32 0.0, %v110
    %112 = vmatmul.f32.gmra.mxu0 %v50
    %v113 = vpop.f32.mrf.mxu0
    %v114 = vadd.f32 0.0, %v113
    %115 = vmatmul.f32.gmra.mxu0 %v51
    %v116 = vpop.f32.mrf.mxu0
    %v117 = vadd.f32 0.0, %v116
    %118 = vmatmul.f32.gmra.mxu0 %v52
    %v119 = vpop.f32.mrf.mxu0
    %v120 = vadd.f32 0.0, %v119
    %121 = vmatmul.f32.gmra.mxu0 %v53
    %v122 = vpop.f32.mrf.mxu0
    %v123 = vadd.f32 0.0, %v122
    %124 = vmatmul.f32.gmra.mxu0 %v54
    %v125 = vpop.f32.mrf.mxu0
    %v126 = vadd.f32 0.0, %v125
    %127 = vmatmul.f32.gmra.mxu0 %v55
    %v128 = vpop.f32.mrf.mxu0
    %v129 = vadd.f32 0.0, %v128
    %130 = vmatmul.f32.gmra.mxu0 %v56
    %v131 = vpop.f32.mrf.mxu0
    %v132 = vadd.f32 0.0, %v131
    %133 = vmatmul.f32.gmra.mxu0 %v57
    %v134 = vpop.f32.mrf.mxu0
    %v135 = vadd.f32 0.0, %v134
    %136 = vmatmul.f32.gmra.mxu0 %v58
    %v137 = vpop.f32.mrf.mxu0
    %v138 = vadd.f32 0.0, %v137
    %139 = vdwg.mxu0
    %140 = vxpose.xlu0.b32.start [1/16] %v93, 128
    %141 = vxpose.xlu0.b32.cont [2/16] %v96, 128
    %142 = vxpose.xlu0.b32.cont [3/16] %v99, 128
    %143 = vxpose.xlu0.b32.cont [4/16] %v102, 128
    %144 = vxpose.xlu0.b32.cont [5/16] %v105, 128
    %145 = vxpose.xlu0.b32.cont [6/16] %v108, 128
    %146 = vxpose.xlu0.b32.cont [7/16] %v111, 128
    %147 = vxpose.xlu0.b32.cont [8/16] %v114, 128
    %148 = vxpose.xlu0.b32.cont [9/16] %v117, 128
    %149 = vxpose.xlu0.b32.cont [10/16] %v120, 128
    %150 = vxpose.xlu0.b32.cont [11/16] %v123, 128
    %151 = vxpose.xlu0.b32.cont [12/16] %v126, 128
    %152 = vxpose.xlu0.b32.cont [13/16] %v129, 128
    %153 = vxpose.xlu0.b32.cont [14/16] %v132, 128
    %154 = vxpose.xlu0.b32.cont [15/16] %v135, 128
    %155 = vxpose.xlu0.b32.end [16/16] %v138, 128
    %v156 = vpop.trf.xlu0
    %v157 = vpop.trf.xlu0
    %v158 = vpop.trf.xlu0
    %v159 = vpop.trf.xlu0
    %v160 = vpop.trf.xlu0
    %v161 = vpop.trf.xlu0
    %v162 = vpop.trf.xlu0
    %v163 = vpop.trf.xlu0
    %v164 = vpop.trf.xlu0
    %v165 = vpop.trf.xlu0
    %v166 = vpop.trf.xlu0
    %v167 = vpop.trf.xlu0
    %v168 = vpop.trf.xlu0
    %v169 = vpop.trf.xlu0
    %v170 = vpop.trf.xlu0
    %v171 = vpop.trf.xlu0
    %172 = vst [vmem:[%s2] sm:$0xff] %v156
    %173 = vst [vmem:[%s2 + $0x8] sm:$0xff] %v157
    %174 = vst [vmem:[%s2 + $0x10] sm:$0xff] %v158
    %175 = vst [vmem:[%s2 + $0x18] sm:$0xff] %v159
    %176 = vst [vmem:[%s2 + $0x20] sm:$0xff] %v160
    %177 = vst [vmem:[%s2 + $0x28] sm:$0xff] %v161
    %178 = vst [vmem:[%s2 + $0x30] sm:$0xff] %v162
    %179 = vst [vmem:[%s2 + $0x38] sm:$0xff] %v163
    %180 = vst [vmem:[%s2 + $0x40] sm:$0xff] %v164
    %181 = vst [vmem:[%s2 + $0x48] sm:$0xff] %v165
    %182 = vst [vmem:[%s2 + $0x50] sm:$0xff] %v166
    %183 = vst [vmem:[%s2 + $0x58] sm:$0xff] %v167
    %184 = vst [vmem:[%s2 + $0x60] sm:$0xff] %v168
    %185 = vst [vmem:[%s2 + $0x68] sm:$0xff] %v169
    %186 = vst [vmem:[%s2 + $0x70] sm:$0xff] %v170
    %187 = vst [vmem:[%s2 + $0x78] sm:$0xff] %v171
    // Predicated region
    $region18: #{inspiration_forward.2} parent=1 // pred_check
      _
    $region19: #{inspiration_forward.2} parent=1 // pred_check_branch
      %189 = sbr.rel (0) target = $region21
    $region20: #{inspiration_forward.2} parent=1 // pred_region
      _
    $region21: #{inspiration_forward.2} parent=1 // pred_fallthru
      _
    // Predicated region
    $region22: #{inspiration_forward.2} parent=1 // pred_check
      _
    $region23: #{inspiration_forward.2} parent=1 // pred_check_branch
      %191 = sbr.rel (0) target = $region25
    $region24: #{inspiration_forward.2} parent=1 // pred_region
      _
    $region25: #{inspiration_forward.2} parent=1 // pred_fallthru
      _
    %192 = vsyncpa [#allocation3], 1
    %193 = vsyncpa [#allocation5], 1

// kernel: inspiration_forward.3
$region0: #{inspiration_forward.3}
  #allocation0 [shape = 'u32[]', space=smem, size = 0x4, offset = 0x4, fixed_abs, tag = 'smem constant byte address 0x4 - core index']
  #allocation1 [shape = 'u32[72,128]{1,0:T(1,128)}', space=vmem, size = 0x9000, scoped, tag = 'internal scratch']
  %s0 = inlined_call_operand.vmem [shape: f32[1,128,128], index: 0, kind: input, shape index: {}]
  %s1 = inlined_call_operand.vmem [shape: f32[2,128,256], index: 1, kind: input, shape index: {}]
  %s2 = inlined_call_operand.vmem [shape: f32[2,128,256], index: 2, kind: output, shape index: {}]
  %s3 = sld [smem:[#allocation0]]
  $region41: #{inspiration_forward.3} parent=0
    _
  %s5 = ssub.s32 1, %s3
  %s6 = scalar_select 0, %s5, %s3
  loop: start=0, step=1, limit=4
  $region2: #{inspiration_forward.3} parent=0 // loop_pre_header
    _
  $region3: #{inspiration_forward.3} parent=0 // loop_header
    %s8 = sphi 0, %s12
    %p9 = scmp.ge.s32.totalorder %s8, 4
    %s15 = sphi 0, %s27
    %s16 = sphi 0, %s23
    %s17 = sphi 0, %s15
    %s18 = sphi 0, %s16
    %s19 = sphi 0, %s17
    %s20 = sphi 0, %s18
    %s28 = sphi 0, %s28
    %s30 = sphi 0, %s28
    %s31 = sphi 0, %s30
    %s45 = sphi 0, %s31
    %s53 = sphi 0, %s55
    %s56 = sphi 0, %s53
    %s57 = sphi 0, %s56
    %s73 = sphi 0, %s57
    %s81 = sphi 0, %s83
    %s84 = sphi 0, %s81
    %s85 = sphi 0, %s84
    %s101 = sphi 0, %s85
  $region4: #{inspiration_forward.3} parent=0 // loop_header_branch
    %11 = sbr.rel (%p9) target = $region8
  $region5: #{inspiration_forward.3} parent=0 // loop_body
    %s13 = ssub.s32 %s8, 1
    %s14 = ssub.s32 %s8, 2
    %s21 = sadd.s32 1, %s16
    %p22 = scmp.ge.s32.totalorder %s21, 1
    %s23 = scalar_select %p22, 0, %s21
    %s24 = sadd.s32 1, %s15
    %s25 = scalar_select %p22, %s24, %s15
    %p26 = scmp.ge.s32.totalorder %s25, 2
    %s27 = scalar_select %p26, 0, %s25
    %s29 = sadd.s32 %s28, 1
    %p32 = scmp.eq.s32.totalorder %s8, 1
    %p33 = scmp.ne.s32.totalorder %s28, %s30
    %p34 = scmp.eq.s32.totalorder %s8, 0
    %p35 = por %p33, %p34
    %p36 = scmp.ne.s32.totalorder %s28, %s30
    %p37 = scmp.eq.s32.totalorder %s13, 1
    %p38 = por %p36, %p37
    %p39 = scmp.ne.s32.totalorder %s30, %s31
    %p40 = scmp.eq.s32.totalorder %s13, 0
    %p41 = por %p39, %p40
    %p42 = scmp.ne.s32.totalorder %s30, %s31
    %p43 = scmp.eq.s32.totalorder %s14, 1
    %p44 = por %p42, %p43
    %p46 = scmp.ne.s32.totalorder %s31, %s45
    %p47 = scmp.eq.s32.totalorder %s14, 0
    %p48 = por %p46, %p47
    %s49 = ssub.s32 %s15, %s27
    %s50 = ssub.s32 %s16, %s23
    %s51 = sor.u32 %s49, %s50
    %p52 = scmp.eq.s32.totalorder %s51, 0
    %s54 = sadd.s32 %s53, 1
    %s55 = scalar_select %p52, %s53, %s54
    %p58 = pneg %p52
    %p59 = scmp.eq.s32.totalorder %s8, 1
    %p60 = por %p58, %p59
    %p61 = scmp.ne.s32.totalorder %s53, %s56
    %p62 = scmp.eq.s32.totalorder %s8, 0
    %p63 = por %p61, %p62
    %p64 = scmp.ne.s32.totalorder %s53, %s56
    %p65 = scmp.eq.s32.totalorder %s13, 1
    %p66 = por %p64, %p65
    %p67 = scmp.ne.s32.totalorder %s56, %s57
    %p68 = scmp.eq.s32.totalorder %s13, 0
    %p69 = por %p67, %p68
    %p70 = scmp.ne.s32.totalorder %s56, %s57
    %p71 = scmp.eq.s32.totalorder %s14, 1
    %p72 = por %p70, %p71
    %p74 = scmp.ne.s32.totalorder %s57, %s73
    %p75 = scmp.eq.s32.totalorder %s14, 0
    %p76 = por %p74, %p75
    %s77 = ssub.s32 %s15, %s27
    %s78 = ssub.s32 %s16, %s23
    %s79 = sor.u32 %s77, %s78
    %p80 = scmp.eq.s32.totalorder %s79, 0
    %s82 = sadd.s32 %s81, 1
    %s83 = scalar_select %p80, %s81, %s82
    %p86 = pneg %p80
    %p87 = scmp.eq.s32.totalorder %s8, 1
    %p88 = por %p86, %p87
    %p89 = scmp.ne.s32.totalorder %s81, %s84
    %p90 = scmp.eq.s32.totalorder %s8, 0
    %p91 = por %p89, %p90
    %p92 = scmp.ne.s32.totalorder %s81, %s84
    %p93 = scmp.eq.s32.totalorder %s13, 1
    %p94 = por %p92, %p93
    %p95 = scmp.ne.s32.totalorder %s84, %s85
    %p96 = scmp.eq.s32.totalorder %s13, 0
    %p97 = por %p95, %p96
    %p98 = scmp.ne.s32.totalorder %s84, %s85
    %p99 = scmp.eq.s32.totalorder %s14, 1
    %p100 = por %p98, %p99
    %p102 = scmp.ne.s32.totalorder %s85, %s101
    %p103 = scmp.eq.s32.totalorder %s14, 0
    %p104 = por %p102, %p103
    %p105 = scmp.le.s32.totalorder 1, %s8
    %p106 = scmp.lt.s32.totalorder %s8, 3
    %p107 = pnand %p105, %p106
    %p108 = pneg %p107
    // Predicated region
    $region9: #{inspiration_forward.3} parent=5 // pred_check
      _
    $region10: #{inspiration_forward.3} parent=5 // pred_check_branch
      %110 = sbr.rel (%p107) target = $region12
    $region11: #{inspiration_forward.3} parent=5 // pred_region
      %s111 = ssub.s32 %s8, 1
      // Predicated region
      $region13: #{inspiration_forward.3} parent=11 // pred_check
        %p112 = pneg %p41
      $region14: #{inspiration_forward.3} parent=11 // pred_check_branch
        %114 = sbr.rel (%p112) target = $region16
      $region15: #{inspiration_forward.3} parent=11 // pred_region
        _
      $region16: #{inspiration_forward.3} parent=11 // pred_fallthru
        _
    $region12: #{inspiration_forward.3} parent=5 // pred_fallthru
      _
    %p115 = scmp.lt.s32.totalorder %s8, 2
    // Predicated region
    $region17: #{inspiration_forward.3} parent=5 // pred_check
      %p116 = pneg %p115
    $region18: #{inspiration_forward.3} parent=5 // pred_check_branch
      %118 = sbr.rel (%p116) target = $region20
    $region19: #{inspiration_forward.3} parent=5 // pred_region
      // Predicated region
      $region21: #{inspiration_forward.3} parent=19 // pred_check
        %p119 = pneg %p63
      $region22: #{inspiration_forward.3} parent=19 // pred_check_branch
        %121 = sbr.rel (%p119) target = $region24
      $region23: #{inspiration_forward.3} parent=19 // pred_region
        %s122 = smul.u32 2, %s16
        %p123 = scmp.lt.s32.totalorder %s15, 1
        %s124 = scalar_select %p123, %s15, 1
        %p125 = scmp.lt.s32.totalorder %s122, 1
        %s126 = scalar_select %p125, %s122, 1
        %s127 = smul.addr %s124, 32
        %s128 = sadd.s32 %s126, %s127
        %s129 = smul.addr %s128, 8
        %s130 = scalar_lea.vmem %s1, %s129
        %s131 = smul.u32 2, %s16
      $region24: #{inspiration_forward.3} parent=19 // pred_fallthru
        _
    $region20: #{inspiration_forward.3} parent=5 // pred_fallthru
      _
    %p132 = scmp.le.s32.totalorder 1, %s8
    %p133 = scmp.lt.s32.totalorder %s8, 3
    %p134 = pnand %p132, %p133
    %p135 = pneg %p134
    // Predicated region
    $region25: #{inspiration_forward.3} parent=5 // pred_check
      _
    $region26: #{inspiration_forward.3} parent=5 // pred_check_branch
      %137 = sbr.rel (%p134) target = $region28
    $region27: #{inspiration_forward.3} parent=5 // pred_region
      %s138 = ssub.s32 %s8, 1
      %p139 = pneg %p41
      %p140 = pneg %p38
      %s141 = smul.u32 2, %s18
      %p142 = scmp.lt.s32.totalorder %s17, 1
      %s143 = scalar_select %p142, %s17, 1
      %p144 = scmp.lt.s32.totalorder %s141, 1
      %s145 = scalar_select %p144, %s141, 1
      %s146 = smul.addr %s143, 32
      %s147 = sadd.s32 %s145, %s146
      %s148 = smul.addr %s147, 8
      %s149 = scalar_lea.vmem %s1, %s148
      %p150 = pneg %p69
      %p151 = pneg %p66
      %p152 = pneg %p97
      %p153 = pneg %p94
      %s154 = smul.u32 2, %s18
      %p155 = scmp.lt.s32.totalorder %s17, 1
      %s156 = scalar_select %p155, %s17, 1
      %p157 = scmp.lt.s32.totalorder %s154, 1
      %s158 = scalar_select %p157, %s154, 1
      %s159 = smul.addr %s156, 32
      %s160 = sadd.s32 %s158, %s159
      %s161 = smul.addr %s160, 8
      %s162 = scalar_lea.vmem %s2, %s161
      %s163 = smul.u32 2, %s18
      %p164 = scmp.lt.s32.totalorder %s17, 1
      %s165 = scalar_select %p164, %s17, 1
      %p166 = scmp.lt.s32.totalorder %s163, 1
      %s167 = scalar_select %p166, %s163, 1
      %s168 = smul.addr %s165, 32
      %s169 = sadd.s32 %s167, %s168
      %s170 = smul.addr %s169, 8
      %s171 = scalar_lea.vmem %s1, %s170
      %s172 = smul.u32 2, %s18
      %s173 = smul.u32 2, %s18
      %p174 = scmp.lt.s32.totalorder %s17, 1
      %s175 = scalar_select %p174, %s17, 1
      %p176 = scmp.lt.s32.totalorder %s173, 1
      %s177 = scalar_select %p176, %s173, 1
      %s178 = smul.addr %s175, 32
      %s179 = sadd.s32 %s177, %s178
      %s180 = smul.addr %s179, 8
      %s181 = scalar_lea.vmem %s2, %s180
      %s182 = smul.u32 2, %s18
      %v183 = vld [vmem:[%s0] sm:$0xff]
      %v184 = vld [vmem:[%s0 + $0x8] sm:$0xff]
      %v185 = vld [vmem:[%s0 + $0x10] sm:$0xff]
      %v186 = vld [vmem:[%s0 + $0x18] sm:$0xff]
      %v187 = vld [vmem:[%s0 + $0x20] sm:$0xff]
      %v188 = vld [vmem:[%s0 + $0x28] sm:$0xff]
      %v189 = vld [vmem:[%s0 + $0x30] sm:$0xff]
      %v190 = vld [vmem:[%s0 + $0x38] sm:$0xff]
      %v191 = vld [vmem:[%s0 + $0x40] sm:$0xff]
      %v192 = vld [vmem:[%s0 + $0x48] sm:$0xff]
      %v193 = vld [vmem:[%s0 + $0x50] sm:$0xff]
      %v194 = vld [vmem:[%s0 + $0x58] sm:$0xff]
      %v195 = vld [vmem:[%s0 + $0x60] sm:$0xff]
      %v196 = vld [vmem:[%s0 + $0x68] sm:$0xff]
      %v197 = vld [vmem:[%s0 + $0x70] sm:$0xff]
      %v198 = vld [vmem:[%s0 + $0x78] sm:$0xff]
      %v199 = vld [vmem:[%s171] sm:$0xff]
      %v200 = vld [vmem:[%s171 + $0x8] sm:$0xff]
      %v201 = vld [vmem:[%s171 + $0x10] sm:$0xff]
      %v202 = vld [vmem:[%s171 + $0x18] sm:$0xff]
      %v203 = vld [vmem:[%s171 + $0x20] sm:$0xff]
      %v204 = vld [vmem:[%s171 + $0x28] sm:$0xff]
      %v205 = vld [vmem:[%s171 + $0x30] sm:$0xff]
      %v206 = vld [vmem:[%s171 + $0x38] sm:$0xff]
      %v207 = vld [vmem:[%s171 + $0x40] sm:$0xff]
      %v208 = vld [vmem:[%s171 + $0x48] sm:$0xff]
      %v209 = vld [vmem:[%s171 + $0x50] sm:$0xff]
      %v210 = vld [vmem:[%s171 + $0x58] sm:$0xff]
      %v211 = vld [vmem:[%s171 + $0x60] sm:$0xff]
      %v212 = vld [vmem:[%s171 + $0x68] sm:$0xff]
      %v213 = vld [vmem:[%s171 + $0x70] sm:$0xff]
      %v214 = vld [vmem:[%s171 + $0x78] sm:$0xff]
      %v215 = vld [vmem:[%s171 + $0x80] sm:$0xff]
      %v216 = vld [vmem:[%s171 + $0x88] sm:$0xff]
      %v217 = vld [vmem:[%s171 + $0x90] sm:$0xff]
      %v218 = vld [vmem:[%s171 + $0x98] sm:$0xff]
      %v219 = vld [vmem:[%s171 + $0xa0] sm:$0xff]
      %v220 = vld [vmem:[%s171 + $0xa8] sm:$0xff]
      %v221 = vld [vmem:[%s171 + $0xb0] sm:$0xff]
      %v222 = vld [vmem:[%s171 + $0xb8] sm:$0xff]
      %v223 = vld [vmem:[%s171 + $0xc0] sm:$0xff]
      %v224 = vld [vmem:[%s171 + $0xc8] sm:$0xff]
      %v225 = vld [vmem:[%s171 + $0xd0] sm:$0xff]
      %v226 = vld [vmem:[%s171 + $0xd8] sm:$0xff]
      %v227 = vld [vmem:[%s171 + $0xe0] sm:$0xff]
      %v228 = vld [vmem:[%s171 + $0xe8] sm:$0xff]
      %v229 = vld [vmem:[%s171 + $0xf0] sm:$0xff]
      %v230 = vld [vmem:[%s171 + $0xf8] sm:$0xff]
      %231 = vmatpush.msra.mxu0 %v229
      %232 = vmatpush.msra.mxu0 %v227
      %233 = vmatpush.msra.mxu0 %v225
      %234 = vmatpush.msra.mxu0 %v223
      %235 = vmatpush.msra.mxu0 %v221
      %236 = vmatpush.msra.mxu0 %v219
      %237 = vmatpush.msra.mxu0 %v217
      %238 = vmatpush.msra.mxu0 %v215
      %239 = vmatpush.msra.mxu0 %v213
      %240 = vmatpush.msra.mxu0 %v211
      %241 = vmatpush.msra.mxu0 %v209
      %242 = vmatpush.msra.mxu0 %v207
      %243 = vmatpush.msra.mxu0 %v205
      %244 = vmatpush.msra.mxu0 %v203
      %245 = vmatpush.msra.mxu0 %v201
      %246 = vmatpush.msra.mxu0 %v199
      %247 = vmatmul.f32.gmra.mxu0 %v183
      %v248 = vpop.f32.mrf.mxu0
      %v249 = vadd.f32 0.0, %v248
      %250 = vmatmul.f32.gmra.mxu0 %v184
      %v251 = vpop.f32.mrf.mxu0
      %v252 = vadd.f32 0.0, %v251
      %253 = vmatmul.f32.gmra.mxu0 %v185
      %v254 = vpop.f32.mrf.mxu0
      %v255 = vadd.f32 0.0, %v254
      %256 = vmatmul.f32.gmra.mxu0 %v186
      %v257 = vpop.f32.mrf.mxu0
      %v258 = vadd.f32 0.0, %v257
      %259 = vmatmul.f32.gmra.mxu0 %v187
      %v260 = vpop.f32.mrf.mxu0
      %v261 = vadd.f32 0.0, %v260
      %262 = vmatmul.f32.gmra.mxu0 %v188
      %v263 = vpop.f32.mrf.mxu0
      %v264 = vadd.f32 0.0, %v263
      %265 = vmatmul.f32.gmra.mxu0 %v189
      %v266 = vpop.f32.mrf.mxu0
      %v267 = vadd.f32 0.0, %v266
      %268 = vmatmul.f32.gmra.mxu0 %v190
      %v269 = vpop.f32.mrf.mxu0
      %v270 = vadd.f32 0.0, %v269
      %271 = vmatmul.f32.gmra.mxu0 %v191
      %v272 = vpop.f32.mrf.mxu0
      %v273 = vadd.f32 0.0, %v272
      %274 = vmatmul.f32.gmra.mxu0 %v192
      %v275 = vpop.f32.mrf.mxu0
      %v276 = vadd.f32 0.0, %v275
      %277 = vmatmul.f32.gmra.mxu0 %v193
      %v278 = vpop.f32.mrf.mxu0
      %v279 = vadd.f32 0.0, %v278
      %280 = vmatmul.f32.gmra.mxu0 %v194
      %v281 = vpop.f32.mrf.mxu0
      %v282 = vadd.f32 0.0, %v281
      %283 = vmatmul.f32.gmra.mxu0 %v195
      %v284 = vpop.f32.mrf.mxu0
      %v285 = vadd.f32 0.0, %v284
      %286 = vmatmul.f32.gmra.mxu0 %v196
      %v287 = vpop.f32.mrf.mxu0
      %v288 = vadd.f32 0.0, %v287
      %289 = vmatmul.f32.gmra.mxu0 %v197
      %v290 = vpop.f32.mrf.mxu0
      %v291 = vadd.f32 0.0, %v290
      %292 = vmatmul.f32.gmra.mxu0 %v198
      %v293 = vpop.f32.mrf.mxu0
      %v294 = vadd.f32 0.0, %v293
      %295 = vdwg.mxu0
      %296 = vmatpush.msra.mxu0 %v230
      %297 = vmatpush.msra.mxu0 %v228
      %298 = vmatpush.msra.mxu0 %v226
      %299 = vmatpush.msra.mxu0 %v224
      %300 = vmatpush.msra.mxu0 %v222
      %301 = vmatpush.msra.mxu0 %v220
      %302 = vmatpush.msra.mxu0 %v218
      %303 = vmatpush.msra.mxu0 %v216
      %304 = vmatpush.msra.mxu0 %v214
      %305 = vmatpush.msra.mxu0 %v212
      %306 = vmatpush.msra.mxu0 %v210
      %307 = vmatpush.msra.mxu0 %v208
      %308 = vmatpush.msra.mxu0 %v206
      %309 = vmatpush.msra.mxu0 %v204
      %310 = vmatpush.msra.mxu0 %v202
      %311 = vmatpush.msra.mxu0 %v200
      %312 = vmatmul.f32.gmra.mxu0 %v183
      %v313 = vpop.f32.mrf.mxu0
      %v314 = vadd.f32 0.0, %v313
      %315 = vmatmul.f32.gmra.mxu0 %v184
      %v316 = vpop.f32.mrf.mxu0
      %v317 = vadd.f32 0.0, %v316
      %318 = vmatmul.f32.gmra.mxu0 %v185
      %v319 = vpop.f32.mrf.mxu0
      %v320 = vadd.f32 0.0, %v319
      %321 = vmatmul.f32.gmra.mxu0 %v186
      %v322 = vpop.f32.mrf.mxu0
      %v323 = vadd.f32 0.0, %v322
      %324 = vmatmul.f32.gmra.mxu0 %v187
      %v325 = vpop.f32.mrf.mxu0
      %v326 = vadd.f32 0.0, %v325
      %327 = vmatmul.f32.gmra.mxu0 %v188
      %v328 = vpop.f32.mrf.mxu0
      %v329 = vadd.f32 0.0, %v328
      %330 = vmatmul.f32.gmra.mxu0 %v189
      %v331 = vpop.f32.mrf.mxu0
      %v332 = vadd.f32 0.0, %v331
      %333 = vmatmul.f32.gmra.mxu0 %v190
      %v334 = vpop.f32.mrf.mxu0
      %v335 = vadd.f32 0.0, %v334
      %336 = vmatmul.f32.gmra.mxu0 %v191
      %v337 = vpop.f32.mrf.mxu0
      %v338 = vadd.f32 0.0, %v337
      %339 = vmatmul.f32.gmra.mxu0 %v192
      %v340 = vpop.f32.mrf.mxu0
      %v341 = vadd.f32 0.0, %v340
      %342 = vmatmul.f32.gmra.mxu0 %v193
      %v343 = vpop.f32.mrf.mxu0
      %v344 = vadd.f32 0.0, %v343
      %345 = vmatmul.f32.gmra.mxu0 %v194
      %v346 = vpop.f32.mrf.mxu0
      %v347 = vadd.f32 0.0, %v346
      %348 = vmatmul.f32.gmra.mxu0 %v195
      %v349 = vpop.f32.mrf.mxu0
      %v350 = vadd.f32 0.0, %v349
      %351 = vmatmul.f32.gmra.mxu0 %v196
      %v352 = vpop.f32.mrf.mxu0
      %v353 = vadd.f32 0.0, %v352
      %354 = vmatmul.f32.gmra.mxu0 %v197
      %v355 = vpop.f32.mrf.mxu0
      %v356 = vadd.f32 0.0, %v355
      %357 = vmatmul.f32.gmra.mxu0 %v198
      %v358 = vpop.f32.mrf.mxu0
      %v359 = vadd.f32 0.0, %v358
      %360 = vdwg.mxu0
      %361 = vst [vmem:[%s181] sm:$0xff] %v249
      %362 = vst [vmem:[%s181 + $0x8] sm:$0xff] %v314
      %363 = vst [vmem:[%s181 + $0x10] sm:$0xff] %v252
      %364 = vst [vmem:[%s181 + $0x18] sm:$0xff] %v317
      %365 = vst [vmem:[%s181 + $0x20] sm:$0xff] %v255
      %366 = vst [vmem:[%s181 + $0x28] sm:$0xff] %v320
      %367 = vst [vmem:[%s181 + $0x30] sm:$0xff] %v258
      %368 = vst [vmem:[%s181 + $0x38] sm:$0xff] %v323
      %369 = vst [vmem:[%s181 + $0x40] sm:$0xff] %v261
      %370 = vst [vmem:[%s181 + $0x48] sm:$0xff] %v326
      %371 = vst [vmem:[%s181 + $0x50] sm:$0xff] %v264
      %372 = vst [vmem:[%s181 + $0x58] sm:$0xff] %v329
      %373 = vst [vmem:[%s181 + $0x60] sm:$0xff] %v267
      %374 = vst [vmem:[%s181 + $0x68] sm:$0xff] %v332
      %375 = vst [vmem:[%s181 + $0x70] sm:$0xff] %v270
      %376 = vst [vmem:[%s181 + $0x78] sm:$0xff] %v335
      %377 = vst [vmem:[%s181 + $0x80] sm:$0xff] %v273
      %378 = vst [vmem:[%s181 + $0x88] sm:$0xff] %v338
      %379 = vst [vmem:[%s181 + $0x90] sm:$0xff] %v276
      %380 = vst [vmem:[%s181 + $0x98] sm:$0xff] %v341
      %381 = vst [vmem:[%s181 + $0xa0] sm:$0xff] %v279
      %382 = vst [vmem:[%s181 + $0xa8] sm:$0xff] %v344
      %383 = vst [vmem:[%s181 + $0xb0] sm:$0xff] %v282
      %384 = vst [vmem:[%s181 + $0xb8] sm:$0xff] %v347
      %385 = vst [vmem:[%s181 + $0xc0] sm:$0xff] %v285
      %386 = vst [vmem:[%s181 + $0xc8] sm:$0xff] %v350
      %387 = vst [vmem:[%s181 + $0xd0] sm:$0xff] %v288
      %388 = vst [vmem:[%s181 + $0xd8] sm:$0xff] %v353
      %389 = vst [vmem:[%s181 + $0xe0] sm:$0xff] %v291
      %390 = vst [vmem:[%s181 + $0xe8] sm:$0xff] %v356
      %391 = vst [vmem:[%s181 + $0xf0] sm:$0xff] %v294
      %392 = vst [vmem:[%s181 + $0xf8] sm:$0xff] %v359
      %s393 = smul.u32 2, %s18
      %p394 = scmp.lt.s32.totalorder %s17, 1
      %s395 = scalar_select %p394, %s17, 1
      %p396 = scmp.lt.s32.totalorder %s393, 1
      %s397 = scalar_select %p396, %s393, 1
      %s398 = smul.addr %s395, 32
      %s399 = sadd.s32 %s397, %s398
      %s400 = smul.addr %s399, 8
      %s401 = scalar_lea.vmem %s2, %s400
      // Predicated region
      $region29: #{inspiration_forward.3} parent=27 // pred_check
        %p402 = pneg %p94
      $region30: #{inspiration_forward.3} parent=27 // pred_check_branch
        %404 = sbr.rel (%p402) target = $region32
      $region31: #{inspiration_forward.3} parent=27 // pred_region
        %s405 = smul.u32 2, %s18
      $region32: #{inspiration_forward.3} parent=27 // pred_fallthru
        _
    $region28: #{inspiration_forward.3} parent=5 // pred_fallthru
      _
    %p406 = scmp.le.s32.totalorder 2, %s8
    // Predicated region
    $region33: #{inspiration_forward.3} parent=5 // pred_check
      %p407 = pneg %p406
    $region34: #{inspiration_forward.3} parent=5 // pred_check_branch
      %409 = sbr.rel (%p407) target = $region36
    $region35: #{inspiration_forward.3} parent=5 // pred_region
      %s410 = ssub.s32 %s8, 2
      // Predicated region
      $region37: #{inspiration_forward.3} parent=35 // pred_check
        %p411 = pneg %p100
      $region38: #{inspiration_forward.3} parent=35 // pred_check_branch
        %413 = sbr.rel (%p411) target = $region40
      $region39: #{inspiration_forward.3} parent=35 // pred_region
        %s414 = smul.u32 2, %s20
        %p415 = scmp.lt.s32.totalorder %s19, 1
        %s416 = scalar_select %p415, %s19, 1
        %p417 = scmp.lt.s32.totalorder %s414, 1
        %s418 = scalar_select %p417, %s414, 1
        %s419 = smul.addr %s416, 32
        %s420 = sadd.s32 %s418, %s419
        %s421 = smul.addr %s420, 8
        %s422 = scalar_lea.vmem %s2, %s421
      $region40: #{inspiration_forward.3} parent=35 // pred_fallthru
        _
    $region36: #{inspiration_forward.3} parent=5 // pred_fallthru
      _
  $region6: #{inspiration_forward.3} parent=0 // loop_footer
    %s12 = sadd.s32 1, %s8
  $region7: #{inspiration_forward.3} parent=0 // loop_footer_branch
    %7 = sbr.rel target = $region3
  $region8: #{inspiration_forward.3} parent=0 // loop_exit
    _

</llo_original>
